<compile_context>
chip_gen: v5e
topology: v5e:2x2
jax: 0.10.0
libtpu: 0.0.40
codegen_flags: <defaults>
</compile_context>

<pallas_src>
import numpy as np
import jax
import jax.numpy as jnp
from jax.experimental import pallas as pl
from jax.experimental.pallas import tpu as pltpu


def _round_up(x, m):
    return ((x + m - 1) // m) * m


# ---------------------------------------------------------------------------
# DFT matrix builders (float64 NumPy; parameter-setup / __init__ equivalent).
# ---------------------------------------------------------------------------
def irfft_real_matrix(n):
    """(n//2+1, n) M such that x @ M == irfft(x + 0j, n) for a real half-spectrum."""
    f = n // 2 + 1
    k = np.arange(f)[:, None].astype(np.float64)
    t = np.arange(n)[None, :].astype(np.float64)
    w = np.where((np.arange(f) == 0) | (np.arange(f) == n // 2), 1.0, 2.0)[:, None]
    return np.cos(2.0 * np.pi * k * t / n) / n * w


def irfft_complex_matrices(n):
    """(f, n) pair (Mr, Mi) with Xre @ Mr + Xim @ Mi == irfft(Xre + 1j*Xim, n)."""
    f = n // 2 + 1
    k = np.arange(f)[:, None].astype(np.float64)
    t = np.arange(n)[None, :].astype(np.float64)
    edge = (np.arange(f) == 0) | (np.arange(f) == n // 2)
    wr = np.where(edge, 1.0, 2.0)[:, None]
    wi = np.where(edge, 0.0, 2.0)[:, None]   # imag of DC/Nyquist ignored (C2R convention)
    mr = np.cos(2.0 * np.pi * k * t / n) / n * wr
    mi = -np.sin(2.0 * np.pi * k * t / n) / n * wi
    return mr, mi


def rfft_matrices(n):
    """(n, n//2+1) pair (Rr, Ri) such that rfft(x) == (x @ Rr) + 1j*(x @ Ri)."""
    f = n // 2 + 1
    t = np.arange(n)[:, None].astype(np.float64)
    k = np.arange(f)[None, :].astype(np.float64)
    ang = 2.0 * np.pi * t * k / n
    return np.cos(ang), -np.sin(ang)


# ---------------------------------------------------------------------------
# Pallas kernel: one (frame_tile, batch-element) block of the forward pass.
#   rows       = frame_tile frames of ONE batch element
#   h_re/h_im  = rfft of the windowed/padded impulse responses (folded matmuls)
#   x_re/x_im  = noise spectrum for exactly those frames (no broadcast needed)
# ---------------------------------------------------------------------------
def _filtered_noise_kernel(h_ref, xre_ref, xim_ref, ar_ref, ai_ref, cr_ref, ci_ref,
                           y_ref):
    hm = h_ref[...]                                            # (ft, f_ir) compute dtype
    h_re = jnp.dot(hm, ar_ref[...], preferred_element_type=jnp.float32)
    h_im = jnp.dot(hm, ai_ref[...], preferred_element_type=jnp.float32)
    x_re = xre_ref[...]                                        # (ft, f_hop) f32
    x_im = xim_ref[...]
    y_re = (h_re * x_re - h_im * x_im).astype(cr_ref.dtype)
    y_im = (h_im * x_re + h_re * x_im).astype(ci_ref.dtype)
    # final irfft back to time domain (attenuation folded into cr/ci).
    y_ref[...] = (jnp.dot(y_re, cr_ref[...], preferred_element_type=jnp.float32) +
                  jnp.dot(y_im, ci_ref[...], preferred_element_type=jnp.float32))


# ---------------------------------------------------------------------------
# Module wrapper.
# ---------------------------------------------------------------------------
class FilteredNoise:
    def __init__(self, sr, out_size_in_seconds, hop_length=256, ir_length=256,
                 attenuation=1.0, key=None, compute_dtype=jnp.bfloat16,
                 frame_tile=512):
        self.out_size = int(sr * out_size_in_seconds)
        self.hop_length = hop_length
        self.ir_length = ir_length
        self.attenuation = float(attenuation)
        self.compute_dtype = compute_dtype
        self.frame_tile_default = int(frame_tile)
        assert hop_length >= ir_length, "hop_length must be >= ir_length"
        assert self.out_size % hop_length == 0, "out_size must be divisible by hop_length"

        if key is None:
            key = jax.random.PRNGKey(0)

        # noise buffer + frame-wise rfft (torch __init__ registered buffer).
        noise = jax.random.uniform(key, (self.out_size,), dtype=jnp.float32) * 2.0 - 1.0
        frames = noise.reshape(-1, hop_length)
        spec = jnp.fft.rfft(frames, axis=-1)                    # (n_frames, hop//2+1)
        self.n_frames = frames.shape[0]
        self.noise_re = jnp.real(spec).astype(jnp.float32)
        self.noise_im = jnp.imag(spec).astype(jnp.float32)
        self.noise_spec_c = spec                                # pure-JAX reference only

        # periodic hann window (torch.hann_window default).
        n = np.arange(ir_length, dtype=np.float64)
        window = 0.5 - 0.5 * np.cos(2.0 * np.pi * n / ir_length)
        self.window = jnp.asarray(window, jnp.float32)          # for the reference

        # fold irfft(ir) -> roll(ir//2) -> hann -> zero-pad(hop) -> rfft into
        # two (f_ir, f_hop) matrices A_r / A_i (all in float64, then cast).
        c_ir = irfft_real_matrix(ir_length)                     # (ir//2+1, ir)
        idx = (np.arange(ir_length) - ir_length // 2) % ir_length
        cp = c_ir[:, idx] * window[None, :]                     # roll + window
        cp = np.pad(cp, ((0, 0), (0, hop_length - ir_length)))  # zero-pad to hop
        rr, ri = rfft_matrices(hop_length)                      # (hop, hop//2+1)
        self.a_r = jnp.asarray(cp @ rr, dtype=compute_dtype)    # (f_ir, f_hop)
        self.a_i = jnp.asarray(cp @ ri, dtype=compute_dtype)

        cr, ci = irfft_complex_matrices(hop_length)             # (hop//2+1, hop)
        self.c_r = jnp.asarray(cr * self.attenuation, dtype=compute_dtype)
        self.c_i = jnp.asarray(ci * self.attenuation, dtype=compute_dtype)

    def __call__(self, h_mag):
        batch, f_ir, n_frames = h_mag.shape
        assert f_ir == self.ir_length // 2 + 1 and n_frames == self.n_frames
        f_hop = self.hop_length // 2 + 1
        hop = self.hop_length

        # frame tile: multiple of 8 (sublane), capped at the default; pad the
        # frame axis up to a multiple of the tile so the grid never collapses.
        frame_tile = min(self.frame_tile_default, _round_up(n_frames, 8))
        frame_tile = _round_up(frame_tile, 8)
        n_frames_p = _round_up(n_frames, frame_tile)
        pad_f = n_frames_p - n_frames
        nfb = n_frames_p // frame_tile

        # rows in (batch, frame)-major order (cheap XLA glue: transpose + cast).
        h_bf = jnp.transpose(h_mag, (0, 2, 1))                  # (batch, n_frames, f_ir)
        if pad_f:
            h_bf = jnp.pad(h_bf, ((0, 0), (0, pad_f), (0, 0)))
        h2d = h_bf.reshape(batch * n_frames_p, f_ir).astype(self.compute_dtype)

        x_re, x_im = self.noise_re, self.noise_im               # (n_frames, f_hop) f32
        if pad_f:
            x_re = jnp.pad(x_re, ((0, pad_f), (0, 0)))
            x_im = jnp.pad(x_im, ((0, pad_f), (0, 0)))

        const = lambda arr: pl.BlockSpec(arr.shape, lambda fi, b: (0, 0))

        # grid = (frame_tiles, batch); batch is the inner (fast) axis so the
        # noise block (indexed only by fi) is fetched once per frame tile.
        y2d = pl.pallas_call(
            _filtered_noise_kernel,
            out_shape=jax.ShapeDtypeStruct((n_frames_p, batch * hop), jnp.float32),
            grid=(nfb, batch),
            in_specs=[
                pl.BlockSpec((frame_tile, f_ir), lambda fi, b: (b * nfb + fi, 0)),
                pl.BlockSpec((frame_tile, f_hop), lambda fi, b: (fi, 0)),
                pl.BlockSpec((frame_tile, f_hop), lambda fi, b: (fi, 0)),
                const(self.a_r), const(self.a_i), const(self.c_r), const(self.c_i),
            ],
            out_specs=pl.BlockSpec((frame_tile, hop), lambda fi, b: (fi, b)),
            compiler_params=pltpu.CompilerParams(
                dimension_semantics=("parallel", "parallel")),
        )(h2d, x_re, x_im, self.a_r, self.a_i, self.c_r, self.c_i)

        if pad_f:
            y2d = y2d[:n_frames]
        # y2d is the row-major flattening of the (frame, batch, hop) tensor, so
        # reshape(batch, -1) reproduces the original torch `.view(batch, -1)`
        # behaviour exactly (frames interleaved across batch for batch > 1).
        return y2d.reshape(batch, -1)[:, :self.out_size]

    # pure-JAX reference mirroring the PyTorch forward (for a sanity check).
    def reference(self, h_mag):
        hc = jnp.transpose(h_mag, (2, 0, 1)).astype(jnp.complex64)   # zero phase
        h = jnp.fft.irfft(hc, n=self.ir_length, axis=-1)
        h = jnp.roll(h, self.ir_length // 2, axis=-1)
        hw = h * self.window[None, None, :]
        hp = jnp.pad(hw, ((0, 0), (0, 0), (0, self.hop_length - self.ir_length)))
        big_h = jnp.fft.rfft(hp, axis=-1)
        y = jnp.fft.irfft(big_h * self.noise_spec_c[:, None, :], n=self.hop_length,
                          axis=-1)
        return y.reshape(h_mag.shape[0], -1)[:, :self.out_size] * self.attenuation


if __name__ == "__main__":
    key = jax.random.PRNGKey(0)
    k_noise, k_h = jax.random.split(key)

    # small shapes: sr=2048, 1 s -> out_size=2048, hop=ir=256 -> 8 frames, 129 bins
    sr, seconds, hop, ir = 2048, 1.0, 256, 256
    batch = 2

    mod_bf16 = FilteredNoise(sr=sr, out_size_in_seconds=seconds, hop_length=hop,
                             ir_length=ir, attenuation=1.0, key=k_noise,
                             compute_dtype=jnp.bfloat16)
    mod_f32 = FilteredNoise(sr=sr, out_size_in_seconds=seconds, hop_length=hop,
                            ir_length=ir, attenuation=1.0, key=k_noise,
                            compute_dtype=jnp.float32)

    h_mag = jax.random.uniform(k_h, (batch, ir // 2 + 1, mod_bf16.n_frames),
                               dtype=jnp.float32)

    y16 = mod_bf16(h_mag)
    jax.block_until_ready(y16)
    y32 = mod_f32(h_mag)
    jax.block_until_ready(y32)
    assert y16.shape == (batch, mod_bf16.out_size)
    assert y32.shape == (batch, mod_f32.out_size)

    ref = mod_f32.reference(h_mag)
    np.testing.assert_allclose(np.asarray(y32), np.asarray(ref), atol=5e-2, rtol=5e-2)
    np.testing.assert_allclose(np.asarray(y16), np.asarray(ref), atol=5e-2, rtol=5e-2)

    print("KERNEL_OK")
</pallas_src>

<mosaic_0001>
module attributes {stable_mosaic.version = 11 : i64} {
  func.func @_filtered_noise_kernel(%arg0: i32, %arg1: i32, %arg2: memref<8x129xbf16, #tpu.memory_space<vmem>>, %arg3: memref<8x129xf32, #tpu.memory_space<vmem>>, %arg4: memref<8x129xf32, #tpu.memory_space<vmem>>, %arg5: memref<129x129xbf16, #tpu.memory_space<vmem>>, %arg6: memref<129x129xbf16, #tpu.memory_space<vmem>>, %arg7: memref<129x256xbf16, #tpu.memory_space<vmem>>, %arg8: memref<129x256xbf16, #tpu.memory_space<vmem>>, %arg9: memref<8x256xf32, #tpu.memory_space<vmem>>) attributes {dimension_semantics = [#tpu.dimension_semantics<parallel>, #tpu.dimension_semantics<parallel>], iteration_bounds = array<i64: 1, 2>, scalar_prefetch = 0 : i64, scratch_operands = 0 : i64, tpu.core_type = #tpu.core_type<tc>, window_params = [{transform_indices = @transform_0, window_bounds = array<i64: 8, 129>}, {transform_indices = @transform_1, window_bounds = array<i64: 8, 129>}, {transform_indices = @transform_2, window_bounds = array<i64: 8, 129>}, {pipeline_mode = #tpu.pipeline_mode<synchronous>, transform_indices = @transform_3, window_bounds = array<i64: 129, 129>}, {pipeline_mode = #tpu.pipeline_mode<synchronous>, transform_indices = @transform_4, window_bounds = array<i64: 129, 129>}, {pipeline_mode = #tpu.pipeline_mode<synchronous>, transform_indices = @transform_5, window_bounds = array<i64: 129, 256>}, {pipeline_mode = #tpu.pipeline_mode<synchronous>, transform_indices = @transform_6, window_bounds = array<i64: 129, 256>}, {transform_indices = @transform_7, window_bounds = array<i64: 8, 256>}]} {
    %c0 = arith.constant 0 : index
    %c0_0 = arith.constant 0 : index
    %0 = vector.load %arg2[%c0, %c0_0] : memref<8x129xbf16, #tpu.memory_space<vmem>>, vector<8x129xbf16>
    %c0_1 = arith.constant 0 : index
    %c0_2 = arith.constant 0 : index
    %1 = vector.load %arg5[%c0_1, %c0_2] : memref<129x129xbf16, #tpu.memory_space<vmem>>, vector<129x129xbf16>
    %cst = arith.constant dense<0.000000e+00> : vector<8x129xf32>
    %2 = tpu.matmul %0, %1, %cst {dimension_numbers = #tpu.dot_dimension_numbers<[1], [0], [0], [1], [0, 0, 1, 1], [], []>} : vector<8x129xbf16>, vector<129x129xbf16>, vector<8x129xf32> -> vector<8x129xf32>
    %c0_3 = arith.constant 0 : index
    %c0_4 = arith.constant 0 : index
    %3 = vector.load %arg6[%c0_3, %c0_4] : memref<129x129xbf16, #tpu.memory_space<vmem>>, vector<129x129xbf16>
    %cst_5 = arith.constant dense<0.000000e+00> : vector<8x129xf32>
    %4 = tpu.matmul %0, %3, %cst_5 {dimension_numbers = #tpu.dot_dimension_numbers<[1], [0], [0], [1], [0, 0, 1, 1], [], []>} : vector<8x129xbf16>, vector<129x129xbf16>, vector<8x129xf32> -> vector<8x129xf32>
    %c0_6 = arith.constant 0 : index
    %c0_7 = arith.constant 0 : index
    %5 = vector.load %arg3[%c0_6, %c0_7] : memref<8x129xf32, #tpu.memory_space<vmem>>, vector<8x129xf32>
    %c0_8 = arith.constant 0 : index
    %c0_9 = arith.constant 0 : index
    %6 = vector.load %arg4[%c0_8, %c0_9] : memref<8x129xf32, #tpu.memory_space<vmem>>, vector<8x129xf32>
    %7 = arith.mulf %2, %5 : vector<8x129xf32>
    %8 = arith.mulf %4, %6 : vector<8x129xf32>
    %9 = arith.subf %7, %8 : vector<8x129xf32>
    %10 = arith.truncf %9 : vector<8x129xf32> to vector<8x129xbf16>
    %11 = arith.mulf %4, %5 : vector<8x129xf32>
    %12 = arith.mulf %2, %6 : vector<8x129xf32>
    %13 = arith.addf %11, %12 : vector<8x129xf32>
    %14 = arith.truncf %13 : vector<8x129xf32> to vector<8x129xbf16>
    %c0_10 = arith.constant 0 : index
    %c0_11 = arith.constant 0 : index
    %15 = vector.load %arg7[%c0_10, %c0_11] : memref<129x256xbf16, #tpu.memory_space<vmem>>, vector<129x256xbf16>
    %cst_12 = arith.constant dense<0.000000e+00> : vector<8x256xf32>
    %16 = tpu.matmul %10, %15, %cst_12 {dimension_numbers = #tpu.dot_dimension_numbers<[1], [0], [0], [1], [0, 0, 1, 1], [], []>} : vector<8x129xbf16>, vector<129x256xbf16>, vector<8x256xf32> -> vector<8x256xf32>
    %c0_13 = arith.constant 0 : index
    %c0_14 = arith.constant 0 : index
    %17 = vector.load %arg8[%c0_13, %c0_14] : memref<129x256xbf16, #tpu.memory_space<vmem>>, vector<129x256xbf16>
    %cst_15 = arith.constant dense<0.000000e+00> : vector<8x256xf32>
    %18 = tpu.matmul %14, %17, %cst_15 {dimension_numbers = #tpu.dot_dimension_numbers<[1], [0], [0], [1], [0, 0, 1, 1], [], []>} : vector<8x129xbf16>, vector<129x256xbf16>, vector<8x256xf32> -> vector<8x256xf32>
    %19 = arith.addf %16, %18 : vector<8x256xf32>
    %c0_16 = arith.constant 0 : index
    %c0_17 = arith.constant 0 : index
    %20 = vector.load %arg9[%c0_16, %c0_17] : memref<8x256xf32, #tpu.memory_space<vmem>>, vector<8x256xf32>
    tpu.vector_store %arg9[%c0_16, %c0_17], %19 {strides = array<i32>} : memref<8x256xf32, #tpu.memory_space<vmem>>, vector<8x256xf32>,
    return
  }
  func.func @transform_0(%arg0: i32, %arg1: i32) -> (i32, i32) {
    %c1_i32 = arith.constant 1 : i32
    %0 = arith.muli %arg1, %c1_i32 : i32
    %1 = arith.addi %0, %arg0 : i32
    %c0_i32 = arith.constant 0 : i32
    %c0_i32_0 = arith.constant 0 : i32
    return %1, %c0_i32 : i32, i32
  }
  func.func @transform_1(%arg0: i32, %arg1: i32) -> (i32, i32) {
    %c0_i32 = arith.constant 0 : i32
    %c0_i32_0 = arith.constant 0 : i32
    return %arg0, %c0_i32 : i32, i32
  }
  func.func @transform_2(%arg0: i32, %arg1: i32) -> (i32, i32) {
    %c0_i32 = arith.constant 0 : i32
    %c0_i32_0 = arith.constant 0 : i32
    return %arg0, %c0_i32 : i32, i32
  }
  func.func @transform_3(%arg0: i32, %arg1: i32) -> (i32, i32) {
    %c0_i32 = arith.constant 0 : i32
    %c0_i32_0 = arith.constant 0 : i32
    %c0_i32_1 = arith.constant 0 : i32
    return %c0_i32, %c0_i32_0 : i32, i32
  }
  func.func @transform_4(%arg0: i32, %arg1: i32) -> (i32, i32) {
    %c0_i32 = arith.constant 0 : i32
    %c0_i32_0 = arith.constant 0 : i32
    %c0_i32_1 = arith.constant 0 : i32
    return %c0_i32, %c0_i32_0 : i32, i32
  }
  func.func @transform_5(%arg0: i32, %arg1: i32) -> (i32, i32) {
    %c0_i32 = arith.constant 0 : i32
    %c0_i32_0 = arith.constant 0 : i32
    %c0_i32_1 = arith.constant 0 : i32
    return %c0_i32, %c0_i32_0 : i32, i32
  }
  func.func @transform_6(%arg0: i32, %arg1: i32) -> (i32, i32) {
    %c0_i32 = arith.constant 0 : i32
    %c0_i32_0 = arith.constant 0 : i32
    %c0_i32_1 = arith.constant 0 : i32
    return %c0_i32, %c0_i32_0 : i32, i32
  }
  func.func @transform_7(%arg0: i32, %arg1: i32) -> (i32, i32) {
    %c0_i32 = arith.constant 0 : i32
    return %arg0, %arg1 : i32, i32
  }
}

</mosaic_0001>

<llo_original>
// kernel: tpu_custom_call.1
$region0: #{tpu_custom_call.1}
  #allocation0 [shape = 'u32[]', space=smem, size = 0x4, offset = 0x4, fixed_abs, tag = 'smem constant byte address 0x4 - core index']
  #allocation1 [shape = 'u32[72,128]{1,0:T(1,128)}', space=vmem, size = 0x9000, scoped, tag = 'internal scratch']
  %s0 = inlined_call_operand.hbm [shape: bf16[16,129], index: 0, kind: input, shape index: {}]
  %s1 = inlined_call_operand.hbm [shape: f32[8,129], index: 1, kind: input, shape index: {}]
  %s2 = inlined_call_operand.hbm [shape: f32[8,129], index: 2, kind: input, shape index: {}]
  %s3 = inlined_call_operand.hbm [shape: bf16[129,129], index: 3, kind: input, shape index: {}]
  %s4 = inlined_call_operand.hbm [shape: bf16[129,129], index: 4, kind: input, shape index: {}]
  %s5 = inlined_call_operand.hbm [shape: bf16[129,256], index: 5, kind: input, shape index: {}]
  %s6 = inlined_call_operand.hbm [shape: bf16[129,256], index: 6, kind: input, shape index: {}]
  %s7 = inlined_call_operand.hbm [shape: f32[8,512], index: 7, kind: output, shape index: {}]
  %s8 = sld [smem:[#allocation0]]
  $region89: #{tpu_custom_call.1} parent=0
    _
  %s10 = ssub.s32 1, %s8
  %s11 = scalar_select 0, %s10, %s8
  $region1: #{tpu_custom_call.1} parent=0
    #allocation2 [shape = 'u8[8192]{0}', space=vmem, size = 0x2000, scoped, tag = 'input window, operand 0']
    #allocation3 [shape = 's32[2]{0}', space=sflag, size = 0x8, scoped, tag = 'scoped memory for tpu_custom_call.1']
    #allocation4 [shape = 's32[2]{0}', space=sflag, size = 0x8, scoped, tag = 'scoped memory for tpu_custom_call.1']
    #allocation5 [shape = 'u8[8192]{0}', space=vmem, size = 0x2000, scoped, tag = 'input window, operand 1, single buffered']
    #allocation6 [shape = 's32[1]{0}', space=sflag, size = 0x4, scoped, tag = 'scoped memory for tpu_custom_call.1']
    #allocation7 [shape = 'u8[8192]{0}', space=vmem, size = 0x2000, scoped, tag = 'input window, operand 2, single buffered']
    #allocation8 [shape = 'u8[69632]{0}', space=vmem, size = 0x11000, scoped, tag = 'input window, operand 3, single buffered']
    #allocation9 [shape = 's32[1]{0}', space=sflag, size = 0x4, scoped, tag = 'scoped memory for tpu_custom_call.1']
    #allocation10 [shape = 'u8[69632]{0}', space=vmem, size = 0x11000, scoped, tag = 'input window, operand 4, single buffered']
    #allocation11 [shape = 'u8[69632]{0}', space=vmem, size = 0x11000, scoped, tag = 'input window, operand 5, single buffered']
    #allocation12 [shape = 's32[1]{0}', space=sflag, size = 0x4, scoped, tag = 'scoped memory for tpu_custom_call.1']
    #allocation13 [shape = 'u8[69632]{0}', space=vmem, size = 0x11000, scoped, tag = 'input window, operand 6, single buffered']
    #allocation14 [shape = 'u8[16384]{0}', space=vmem, size = 0x4000, scoped, tag = 'output window, operand 0']
    %12 = vsyncpa [#allocation3], 0
    %s13 = scalar_lea.sflag [#allocation3], 1
    %14 = vsyncpa %s13, 0
    %15 = vsyncpa [#allocation6], 0
    %16 = vsyncpa [#allocation9], 0
    %17 = vsyncpa [#allocation12], 0
    %18 = vsyncpa [#allocation4], 0
    %s19 = scalar_lea.sflag [#allocation4], 1
    %20 = vsyncpa %s19, 0
    loop: start=0, step=1, limit=4
    $region2: #{tpu_custom_call.1} parent=1 // loop_pre_header
      _
    $region3: #{tpu_custom_call.1} parent=1 // loop_header
      %s22 = sphi 0, %s26
      %p23 = scmp.ge.s32.totalorder %s22, 4
      %s29 = sphi 0, %s41
      %s30 = sphi 0, %s37
      %s31 = sphi 0, %s29
      %s32 = sphi 0, %s30
      %s33 = sphi 0, %s31
      %s34 = sphi 0, %s32
      %s46 = sphi 0, %s48
      %s49 = sphi 0, %s46
      %s50 = sphi 0, %s49
      %s66 = sphi 0, %s50
      %s72 = sphi 0, %s74
      %s75 = sphi 0, %s72
      %s76 = sphi 0, %s75
      %s92 = sphi 0, %s76
      %s98 = sphi 0, %s100
      %s101 = sphi 0, %s98
      %s102 = sphi 0, %s101
      %s118 = sphi 0, %s102
      %s122 = sphi 0, %s122
      %s124 = sphi 0, %s122
      %s125 = sphi 0, %s124
      %s139 = sphi 0, %s125
      %s143 = sphi 0, %s143
      %s145 = sphi 0, %s143
      %s146 = sphi 0, %s145
      %s160 = sphi 0, %s146
      %s164 = sphi 0, %s164
      %s166 = sphi 0, %s164
      %s167 = sphi 0, %s166
      %s181 = sphi 0, %s167
      %s185 = sphi 0, %s185
      %s187 = sphi 0, %s185
      %s188 = sphi 0, %s187
      %s202 = sphi 0, %s188
      %s210 = sphi 0, %s212
      %s213 = sphi 0, %s210
      %s214 = sphi 0, %s213
      %s230 = sphi 0, %s214
    $region4: #{tpu_custom_call.1} parent=1 // loop_header_branch
      %25 = sbr.rel (%p23) target = $region8
    $region5: #{tpu_custom_call.1} parent=1 // loop_body
      %s27 = ssub.s32 %s22, 1
      %s28 = ssub.s32 %s22, 2
      %s35 = sadd.s32 1, %s30
      %p36 = scmp.ge.s32.totalorder %s35, 2
      %s37 = scalar_select %p36, 0, %s35
      %s38 = sadd.s32 1, %s29
      %s39 = scalar_select %p36, %s38, %s29
      %p40 = scmp.ge.s32.totalorder %s39, 1
      %s41 = scalar_select %p40, 0, %s39
      %s42 = sadd.s32 %s30, %s29
      %s43 = sadd.s32 %s37, %s41
      %s44 = ssub.s32 %s42, %s43
      %p45 = scmp.eq.s32.totalorder %s44, 0
      %s47 = sadd.s32 %s46, 1
      %s48 = scalar_select %p45, %s46, %s47
      %p51 = pneg %p45
      %p52 = scmp.eq.s32.totalorder %s22, 1
      %p53 = por %p51, %p52
      %p54 = scmp.ne.s32.totalorder %s46, %s49
      %p55 = scmp.eq.s32.totalorder %s22, 0
      %p56 = por %p54, %p55
      %p57 = scmp.ne.s32.totalorder %s46, %s49
      %p58 = scmp.eq.s32.totalorder %s27, 1
      %p59 = por %p57, %p58
      %p60 = scmp.ne.s32.totalorder %s49, %s50
      %p61 = scmp.eq.s32.totalorder %s27, 0
      %p62 = por %p60, %p61
      %p63 = scmp.ne.s32.totalorder %s49, %s50
      %p64 = scmp.eq.s32.totalorder %s28, 1
      %p65 = por %p63, %p64
      %p67 = scmp.ne.s32.totalorder %s50, %s66
      %p68 = scmp.eq.s32.totalorder %s28, 0
      %p69 = por %p67, %p68
      %s70 = ssub.s32 %s29, %s41
      %p71 = scmp.eq.s32.totalorder %s70, 0
      %s73 = sadd.s32 %s72, 1
      %s74 = scalar_select %p71, %s72, %s73
      %p77 = pneg %p71
      %p78 = scmp.eq.s32.totalorder %s22, 1
      %p79 = por %p77, %p78
      %p80 = scmp.ne.s32.totalorder %s72, %s75
      %p81 = scmp.eq.s32.totalorder %s22, 0
      %p82 = por %p80, %p81
      %p83 = scmp.ne.s32.totalorder %s72, %s75
      %p84 = scmp.eq.s32.totalorder %s27, 1
      %p85 = por %p83, %p84
      %p86 = scmp.ne.s32.totalorder %s75, %s76
      %p87 = scmp.eq.s32.totalorder %s27, 0
      %p88 = por %p86, %p87
      %p89 = scmp.ne.s32.totalorder %s75, %s76
      %p90 = scmp.eq.s32.totalorder %s28, 1
      %p91 = por %p89, %p90
      %p93 = scmp.ne.s32.totalorder %s76, %s92
      %p94 = scmp.eq.s32.totalorder %s28, 0
      %p95 = por %p93, %p94
      %s96 = ssub.s32 %s29, %s41
      %p97 = scmp.eq.s32.totalorder %s96, 0
      %s99 = sadd.s32 %s98, 1
      %s100 = scalar_select %p97, %s98, %s99
      %p103 = pneg %p97
      %p104 = scmp.eq.s32.totalorder %s22, 1
      %p105 = por %p103, %p104
      %p106 = scmp.ne.s32.totalorder %s98, %s101
      %p107 = scmp.eq.s32.totalorder %s22, 0
      %p108 = por %p106, %p107
      %p109 = scmp.ne.s32.totalorder %s98, %s101
      %p110 = scmp.eq.s32.totalorder %s27, 1
      %p111 = por %p109, %p110
      %p112 = scmp.ne.s32.totalorder %s101, %s102
      %p113 = scmp.eq.s32.totalorder %s27, 0
      %p114 = por %p112, %p113
      %p115 = scmp.ne.s32.totalorder %s101, %s102
      %p116 = scmp.eq.s32.totalorder %s28, 1
      %p117 = por %p115, %p116
      %p119 = scmp.ne.s32.totalorder %s102, %s118
      %p120 = scmp.eq.s32.totalorder %s28, 0
      %p121 = por %p119, %p120
      %s123 = sadd.s32 %s122, 1
      %p126 = scmp.eq.s32.totalorder %s22, 1
      %p127 = scmp.ne.s32.totalorder %s122, %s124
      %p128 = scmp.eq.s32.totalorder %s22, 0
      %p129 = por %p127, %p128
      %p130 = scmp.ne.s32.totalorder %s122, %s124
      %p131 = scmp.eq.s32.totalorder %s27, 1
      %p132 = por %p130, %p131
      %p133 = scmp.ne.s32.totalorder %s124, %s125
      %p134 = scmp.eq.s32.totalorder %s27, 0
      %p135 = por %p133, %p134
      %p136 = scmp.ne.s32.totalorder %s124, %s125
      %p137 = scmp.eq.s32.totalorder %s28, 1
      %p138 = por %p136, %p137
      %p140 = scmp.ne.s32.totalorder %s125, %s139
      %p141 = scmp.eq.s32.totalorder %s28, 0
      %p142 = por %p140, %p141
      %s144 = sadd.s32 %s143, 1
      %p147 = scmp.eq.s32.totalorder %s22, 1
      %p148 = scmp.ne.s32.totalorder %s143, %s145
      %p149 = scmp.eq.s32.totalorder %s22, 0
      %p150 = por %p148, %p149
      %p151 = scmp.ne.s32.totalorder %s143, %s145
      %p152 = scmp.eq.s32.totalorder %s27, 1
      %p153 = por %p151, %p152
      %p154 = scmp.ne.s32.totalorder %s145, %s146
      %p155 = scmp.eq.s32.totalorder %s27, 0
      %p156 = por %p154, %p155
      %p157 = scmp.ne.s32.totalorder %s145, %s146
      %p158 = scmp.eq.s32.totalorder %s28, 1
      %p159 = por %p157, %p158
      %p161 = scmp.ne.s32.totalorder %s146, %s160
      %p162 = scmp.eq.s32.totalorder %s28, 0
      %p163 = por %p161, %p162
      %s165 = sadd.s32 %s164, 1
      %p168 = scmp.eq.s32.totalorder %s22, 1
      %p169 = scmp.ne.s32.totalorder %s164, %s166
      %p170 = scmp.eq.s32.totalorder %s22, 0
      %p171 = por %p169, %p170
      %p172 = scmp.ne.s32.totalorder %s164, %s166
      %p173 = scmp.eq.s32.totalorder %s27, 1
      %p174 = por %p172, %p173
      %p175 = scmp.ne.s32.totalorder %s166, %s167
      %p176 = scmp.eq.s32.totalorder %s27, 0
      %p177 = por %p175, %p176
      %p178 = scmp.ne.s32.totalorder %s166, %s167
      %p179 = scmp.eq.s32.totalorder %s28, 1
      %p180 = por %p178, %p179
      %p182 = scmp.ne.s32.totalorder %s167, %s181
      %p183 = scmp.eq.s32.totalorder %s28, 0
      %p184 = por %p182, %p183
      %s186 = sadd.s32 %s185, 1
      %p189 = scmp.eq.s32.totalorder %s22, 1
      %p190 = scmp.ne.s32.totalorder %s185, %s187
      %p191 = scmp.eq.s32.totalorder %s22, 0
      %p192 = por %p190, %p191
      %p193 = scmp.ne.s32.totalorder %s185, %s187
      %p194 = scmp.eq.s32.totalorder %s27, 1
      %p195 = por %p193, %p194
      %p196 = scmp.ne.s32.totalorder %s187, %s188
      %p197 = scmp.eq.s32.totalorder %s27, 0
      %p198 = por %p196, %p197
      %p199 = scmp.ne.s32.totalorder %s187, %s188
      %p200 = scmp.eq.s32.totalorder %s28, 1
      %p201 = por %p199, %p200
      %p203 = scmp.ne.s32.totalorder %s188, %s202
      %p204 = scmp.eq.s32.totalorder %s28, 0
      %p205 = por %p203, %p204
      %s206 = ssub.s32 %s29, %s41
      %s207 = ssub.s32 %s30, %s37
      %s208 = sor.u32 %s206, %s207
      %p209 = scmp.eq.s32.totalorder %s208, 0
      %s211 = sadd.s32 %s210, 1
      %s212 = scalar_select %p209, %s210, %s211
      %p215 = pneg %p209
      %p216 = scmp.eq.s32.totalorder %s22, 1
      %p217 = por %p215, %p216
      %p218 = scmp.ne.s32.totalorder %s210, %s213
      %p219 = scmp.eq.s32.totalorder %s22, 0
      %p220 = por %p218, %p219
      %p221 = scmp.ne.s32.totalorder %s210, %s213
      %p222 = scmp.eq.s32.totalorder %s27, 1
      %p223 = por %p221, %p222
      %p224 = scmp.ne.s32.totalorder %s213, %s214
      %p225 = scmp.eq.s32.totalorder %s27, 0
      %p226 = por %p224, %p225
      %p227 = scmp.ne.s32.totalorder %s213, %s214
      %p228 = scmp.eq.s32.totalorder %s28, 1
      %p229 = por %p227, %p228
      %p231 = scmp.ne.s32.totalorder %s214, %s230
      %p232 = scmp.eq.s32.totalorder %s28, 0
      %p233 = por %p231, %p232
      %p234 = scmp.le.s32.totalorder 1, %s22
      %p235 = scmp.lt.s32.totalorder %s22, 3
      %p236 = pnand %p234, %p235
      %p237 = pneg %p236
      // Predicated region
      $region9: #{tpu_custom_call.1} parent=5 // pred_check
        _
      $region10: #{tpu_custom_call.1} parent=5 // pred_check_branch
        %239 = sbr.rel (%p236) target = $region12
      $region11: #{tpu_custom_call.1} parent=5 // pred_region
        %s240 = ssub.s32 %s22, 1
        // Predicated region
        $region13: #{tpu_custom_call.1} parent=11 // pred_check
          %p241 = pneg %p88
        $region14: #{tpu_custom_call.1} parent=11 // pred_check_branch
          %243 = sbr.rel (%p241) target = $region16
        $region15: #{tpu_custom_call.1} parent=11 // pred_region
          %245 = vsyncadd [#allocation6], 0
          %s246 = smul.addr %s31, 2
          %s247 = smul.addr %s246, 8
          %s248 = scalar_lea.hbm %s1, %s247
          %s250 = sshll.u32 %s248, 4
          %s251 = int_to_ptr.hbm [resolvable:$true] %s250
          %s252 = sshll.u32 [#allocation5], 4
          %s253 = int_to_ptr.vmem [resolvable:$true] %s252
          %255 = dma.hbm_to_vmem [thread:$0]  %s251, 256, %s253, [#allocation6]
        $region16: #{tpu_custom_call.1} parent=11 // pred_fallthru
          _
        // Predicated region
        $region17: #{tpu_custom_call.1} parent=11 // pred_check
          %p256 = pneg %p114
        $region18: #{tpu_custom_call.1} parent=11 // pred_check_branch
          %258 = sbr.rel (%p256) target = $region20
        $region19: #{tpu_custom_call.1} parent=11 // pred_region
          %260 = vsyncadd [#allocation6], 0
          %s261 = smul.addr %s31, 2
          %s262 = smul.addr %s261, 8
          %s263 = scalar_lea.hbm %s2, %s262
          %s265 = sshll.u32 %s263, 4
          %s266 = int_to_ptr.hbm [resolvable:$true] %s265
          %s267 = sshll.u32 [#allocation7], 4
          %s268 = int_to_ptr.vmem [resolvable:$true] %s267
          %270 = dma.hbm_to_vmem [thread:$0]  %s266, 256, %s268, [#allocation6]
        $region20: #{tpu_custom_call.1} parent=11 // pred_fallthru
          _
        // Predicated region
        $region21: #{tpu_custom_call.1} parent=11 // pred_check
          %p271 = pneg %p135
        $region22: #{tpu_custom_call.1} parent=11 // pred_check_branch
          %273 = sbr.rel (%p271) target = $region24
        $region23: #{tpu_custom_call.1} parent=11 // pred_region
          %275 = vsyncadd [#allocation9], 0
          %s276 = sshll.u32 %s3, 4
          %s277 = int_to_ptr.hbm [resolvable:$true] %s276
          %s278 = sshll.u32 [#allocation8], 4
          %s279 = int_to_ptr.vmem [resolvable:$true] %s278
          %284 = dma.hbm_to_vmem [thread:$0]  %s277, 2176, %s279, [#allocation9], 128, 128, 8
        $region24: #{tpu_custom_call.1} parent=11 // pred_fallthru
          _
        // Predicated region
        $region25: #{tpu_custom_call.1} parent=11 // pred_check
          %p285 = pneg %p156
        $region26: #{tpu_custom_call.1} parent=11 // pred_check_branch
          %287 = sbr.rel (%p285) target = $region28
        $region27: #{tpu_custom_call.1} parent=11 // pred_region
          %289 = vsyncadd [#allocation9], 0
          %s290 = sshll.u32 %s4, 4
          %s291 = int_to_ptr.hbm [resolvable:$true] %s290
          %s292 = sshll.u32 [#allocation10], 4
          %s293 = int_to_ptr.vmem [resolvable:$true] %s292
          %298 = dma.hbm_to_vmem [thread:$0]  %s291, 2176, %s293, [#allocation9], 128, 128, 8
        $region28: #{tpu_custom_call.1} parent=11 // pred_fallthru
          _
        // Predicated region
        $region29: #{tpu_custom_call.1} parent=11 // pred_check
          %p299 = pneg %p177
        $region30: #{tpu_custom_call.1} parent=11 // pred_check_branch
          %301 = sbr.rel (%p299) target = $region32
        $region31: #{tpu_custom_call.1} parent=11 // pred_region
          %303 = vsyncadd [#allocation12], 0
          %s304 = sshll.u32 %s5, 4
          %s305 = int_to_ptr.hbm [resolvable:$true] %s304
          %s306 = sshll.u32 [#allocation11], 4
          %s307 = int_to_ptr.vmem [resolvable:$true] %s306
          %312 = dma.hbm_to_vmem [thread:$0]  %s305, 2176, %s307, [#allocation12], 128, 128, 8
        $region32: #{tpu_custom_call.1} parent=11 // pred_fallthru
          _
        // Predicated region
        $region33: #{tpu_custom_call.1} parent=11 // pred_check
          %p313 = pneg %p198
        $region34: #{tpu_custom_call.1} parent=11 // pred_check_branch
          %315 = sbr.rel (%p313) target = $region36
        $region35: #{tpu_custom_call.1} parent=11 // pred_region
          %317 = vsyncadd [#allocation12], 0
          %s318 = sshll.u32 %s6, 4
          %s319 = int_to_ptr.hbm [resolvable:$true] %s318
          %s320 = sshll.u32 [#allocation13], 4
          %s321 = int_to_ptr.vmem [resolvable:$true] %s320
          %326 = dma.hbm_to_vmem [thread:$0]  %s319, 2176, %s321, [#allocation12], 128, 128, 8
        $region36: #{tpu_custom_call.1} parent=11 // pred_fallthru
          _
      $region12: #{tpu_custom_call.1} parent=5 // pred_fallthru
        _
      %p327 = scmp.lt.s32.totalorder %s22, 2
      // Predicated region
      $region37: #{tpu_custom_call.1} parent=5 // pred_check
        %p328 = pneg %p327
      $region38: #{tpu_custom_call.1} parent=5 // pred_check_branch
        %330 = sbr.rel (%p328) target = $region40
      $region39: #{tpu_custom_call.1} parent=5 // pred_region
        // Predicated region
        $region41: #{tpu_custom_call.1} parent=39 // pred_check
          %p331 = pneg %p56
        $region42: #{tpu_custom_call.1} parent=39 // pred_check_branch
          %333 = sbr.rel (%p331) target = $region44
        $region43: #{tpu_custom_call.1} parent=39 // pred_region
          %s334 = sand.u32 %s46, 1
          %s335 = scalar_lea.sflag [#allocation3], %s334
          %s336 = sand.u32 %s46, 1
          %s337 = smul.addr %s336, 8
          %s338 = scalar_lea.vmem [#allocation2], %s337
          %s339 = sadd.s32 %s30, %s29
          %341 = vsyncadd %s335, 0
          %s342 = smul.addr %s339, 2
          %s343 = smul.addr %s342, 4
          %s344 = scalar_lea.hbm %s0, %s343
          %s346 = sshll.u32 %s344, 4
          %s347 = int_to_ptr.hbm [resolvable:$true] %s346
          %s348 = sshll.u32 %s338, 4
          %s349 = int_to_ptr.vmem [resolvable:$true] %s348
          %351 = dma.hbm_to_vmem [thread:$0]  %s347, 128, %s349, %s335
        $region44: #{tpu_custom_call.1} parent=39 // pred_fallthru
          _
      $region40: #{tpu_custom_call.1} parent=5 // pred_fallthru
        _
      %p352 = scmp.le.s32.totalorder 1, %s22
      %p353 = scmp.lt.s32.totalorder %s22, 3
      %p354 = pnand %p352, %p353
      %p355 = pneg %p354
      // Predicated region
      $region45: #{tpu_custom_call.1} parent=5 // pred_check
        _
      $region46: #{tpu_custom_call.1} parent=5 // pred_check_branch
        %357 = sbr.rel (%p354) target = $region48
      $region47: #{tpu_custom_call.1} parent=5 // pred_region
        %s358 = ssub.s32 %s22, 1
        %s359 = sand.u32 %s49, 1
        %s360 = scalar_lea.sflag [#allocation3], %s359
        %s361 = sand.u32 %s49, 1
        %s362 = smul.addr %s361, 8
        %s363 = scalar_lea.vmem [#allocation2], %s362
        // Predicated region
        $region49: #{tpu_custom_call.1} parent=47 // pred_check
          %p364 = pneg %p62
        $region50: #{tpu_custom_call.1} parent=47 // pred_check_branch
          %366 = sbr.rel (%p364) target = $region52
        $region51: #{tpu_custom_call.1} parent=47 // pred_region
          %368 = dma.done %s360, 128
        $region52: #{tpu_custom_call.1} parent=47 // pred_fallthru
          _
        // Predicated region
        $region53: #{tpu_custom_call.1} parent=47 // pred_check
          %p369 = pneg %p88
        $region54: #{tpu_custom_call.1} parent=47 // pred_check_branch
          %371 = sbr.rel (%p369) target = $region56
        $region55: #{tpu_custom_call.1} parent=47 // pred_region
          %373 = dma.done [#allocation6], 256
        $region56: #{tpu_custom_call.1} parent=47 // pred_fallthru
          _
        // Predicated region
        $region57: #{tpu_custom_call.1} parent=47 // pred_check
          %p374 = pneg %p114
        $region58: #{tpu_custom_call.1} parent=47 // pred_check_branch
          %376 = sbr.rel (%p374) target = $region60
        $region59: #{tpu_custom_call.1} parent=47 // pred_region
          %378 = dma.done [#allocation6], 256
        $region60: #{tpu_custom_call.1} parent=47 // pred_fallthru
          _
        // Predicated region
        $region61: #{tpu_custom_call.1} parent=47 // pred_check
          %p379 = pneg %p135
        $region62: #{tpu_custom_call.1} parent=47 // pred_check_branch
          %381 = sbr.rel (%p379) target = $region64
        $region63: #{tpu_custom_call.1} parent=47 // pred_region
          %383 = dma.done [#allocation9], 2176
        $region64: #{tpu_custom_call.1} parent=47 // pred_fallthru
          _
        // Predicated region
        $region65: #{tpu_custom_call.1} parent=47 // pred_check
          %p384 = pneg %p156
        $region66: #{tpu_custom_call.1} parent=47 // pred_check_branch
          %386 = sbr.rel (%p384) target = $region68
        $region67: #{tpu_custom_call.1} parent=47 // pred_region
          %388 = dma.done [#allocation9], 2176
        $region68: #{tpu_custom_call.1} parent=47 // pred_fallthru
          _
        // Predicated region
        $region69: #{tpu_custom_call.1} parent=47 // pred_check
          %p389 = pneg %p177
        $region70: #{tpu_custom_call.1} parent=47 // pred_check_branch
          %391 = sbr.rel (%p389) target = $region72
        $region71: #{tpu_custom_call.1} parent=47 // pred_region
          %393 = dma.done [#allocation12], 2176
        $region72: #{tpu_custom_call.1} parent=47 // pred_fallthru
          _
        // Predicated region
        $region73: #{tpu_custom_call.1} parent=47 // pred_check
          %p394 = pneg %p198
        $region74: #{tpu_custom_call.1} parent=47 // pred_check_branch
          %396 = sbr.rel (%p394) target = $region76
        $region75: #{tpu_custom_call.1} parent=47 // pred_region
          %398 = dma.done [#allocation12], 2176
        $region76: #{tpu_custom_call.1} parent=47 // pred_fallthru
          _
        %s399 = sand.u32 %s49, 1
        %s400 = scalar_lea.sflag [#allocation3], %s399
        %s401 = sand.u32 %s49, 1
        %s402 = smul.addr %s401, 8
        %s403 = scalar_lea.vmem [#allocation2], %s402
        %p404 = pneg %p62
        %p405 = pneg %p59
        %p406 = pneg %p88
        %p407 = pneg %p85
        %p408 = pneg %p114
        %p409 = pneg %p111
        %p410 = pneg %p135
        %p411 = pneg %p132
        %p412 = pneg %p156
        %p413 = pneg %p153
        %p414 = pneg %p177
        %p415 = pneg %p174
        %p416 = pneg %p198
        %p417 = pneg %p195
        %p418 = pneg %p226
        %p419 = pneg %p223
        %s420 = sand.u32 %s213, 1
        %s421 = scalar_lea.sflag [#allocation4], %s420
        %s422 = sand.u32 %s213, 1
        %s423 = smul.addr %s422, 16
        %s424 = scalar_lea.vmem [#allocation14], %s423
        %s425 = sadd.s32 %s32, %s31
        %s426 = smul.u32 2, %s32
        %v428 = vld [vmem:[%s363] sm:$0xff]
        %v429 = vld [vmem:[#allocation8] sm:$0xff]
        %v430 = vld [vmem:[#allocation8 + $0x8] sm:$0xff]
        %v431 = vld [vmem:[#allocation8 + $0x10] sm:$0xff]
        %v432 = vld [vmem:[#allocation8 + $0x18] sm:$0xff]
        %v433 = vld [vmem:[#allocation8 + $0x20] sm:$0xff]
        %v434 = vld [vmem:[#allocation8 + $0x28] sm:$0xff]
        %v435 = vld [vmem:[#allocation8 + $0x30] sm:$0xff]
        %v436 = vld [vmem:[#allocation8 + $0x38] sm:$0xff]
        %v437 = vld [vmem:[#allocation8 + $0x40] sm:$0xff]
        %v438 = vld [vmem:[#allocation8 + $0x48] sm:$0xff]
        %v439 = vld [vmem:[#allocation8 + $0x50] sm:$0xff]
        %v440 = vld [vmem:[#allocation8 + $0x58] sm:$0xff]
        %v441 = vld [vmem:[#allocation8 + $0x60] sm:$0xff]
        %v442 = vld [vmem:[#allocation8 + $0x68] sm:$0xff]
        %v443 = vld [vmem:[#allocation8 + $0x70] sm:$0xff]
        %v444 = vld [vmem:[#allocation8 + $0x78] sm:$0xff]
        %v445 = vld [vmem:[#allocation8 + $0x80] sm:$0x11]
        %v447 = vunpack.c.l.b16 %v428
        %v448 = vunpack.c.h.b16 %v428
        %v449 = vpack.c.b16 %v447, %v447
        %v450 = vpack.c.b16 %v448, %v448
        %v469 = vunpack.c.l.b16 %v429
        %v470 = vunpack.c.h.b16 %v429
        %v471 = vunpack.c.l.b16 %v430
        %v472 = vunpack.c.h.b16 %v430
        %v473 = vunpack.c.l.b16 %v431
        %v474 = vunpack.c.h.b16 %v431
        %v475 = vunpack.c.l.b16 %v432
        %v476 = vunpack.c.h.b16 %v432
        %v477 = vunpack.c.l.b16 %v433
        %v478 = vunpack.c.h.b16 %v433
        %v479 = vunpack.c.l.b16 %v434
        %v480 = vunpack.c.h.b16 %v434
        %v481 = vunpack.c.l.b16 %v435
        %v482 = vunpack.c.h.b16 %v435
        %v483 = vunpack.c.l.b16 %v436
        %v484 = vunpack.c.h.b16 %v436
        %v485 = vunpack.c.l.b16 %v437
        %v486 = vunpack.c.h.b16 %v437
        %v487 = vunpack.c.l.b16 %v438
        %v488 = vunpack.c.h.b16 %v438
        %v489 = vunpack.c.l.b16 %v439
        %v490 = vunpack.c.h.b16 %v439
        %v491 = vunpack.c.l.b16 %v440
        %v492 = vunpack.c.h.b16 %v440
        %v493 = vunpack.c.l.b16 %v441
        %v494 = vunpack.c.h.b16 %v441
        %v495 = vunpack.c.l.b16 %v442
        %v496 = vunpack.c.h.b16 %v442
        %v497 = vunpack.c.l.b16 %v443
        %v498 = vunpack.c.h.b16 %v443
        %v499 = vunpack.c.l.b16 %v444
        %v500 = vunpack.c.h.b16 %v444
        %v501 = vunpack.c.l.b16 %v445
        %v502 = vunpack.c.h.b16 %v445
        %v503 = vpack.c.b16 %v471, %v469
        %v504 = vpack.c.b16 %v472, %v470
        %v505 = vpack.c.b16 %v475, %v473
        %v506 = vpack.c.b16 %v476, %v474
        %v507 = vpack.c.b16 %v479, %v477
        %v508 = vpack.c.b16 %v480, %v478
        %v509 = vpack.c.b16 %v483, %v481
        %v510 = vpack.c.b16 %v484, %v482
        %v511 = vpack.c.b16 %v487, %v485
        %v512 = vpack.c.b16 %v488, %v486
        %v513 = vpack.c.b16 %v491, %v489
        %v514 = vpack.c.b16 %v492, %v490
        %v515 = vpack.c.b16 %v495, %v493
        %v516 = vpack.c.b16 %v496, %v494
        %v517 = vpack.c.b16 %v499, %v497
        %v518 = vpack.c.b16 %v500, %v498
        %v519 = vpack.c.b16 %v501, %v501
        %v520 = vpack.c.b16 %v502, %v502
        %vm537 = vcmask 7168
        %v539 = vsel %vm537, %v450, 0
        %vm541 = vcmask 1040384
        %v542 = vsel 0, 4294967295, 65535
        %v543 = vsel %vm541, %v542, 0
        %v545 = vand.u32 %v519, %v543
        %v548 = vand.u32 %v520, %v543
        %550 = vmatpush.bf16.msra.mxu0 %v517
        %551 = vmatpush.bf16.msra.mxu0 %v515
        %552 = vmatpush.bf16.msra.mxu0 %v513
        %553 = vmatpush.bf16.msra.mxu0 %v511
        %554 = vmatpush.bf16.msra.mxu0 %v509
        %555 = vmatpush.bf16.msra.mxu0 %v507
        %556 = vmatpush.bf16.msra.mxu0 %v505
        %557 = vmatpush.bf16.msra.mxu0 %v503
        %558 = vmatmul.bf16.gmra.mxu0 %v449
        %v559 = vpop.f32.mrf.mxu0
        %v560 = vadd.f32 0.0, %v559
        %v561 = vpop.f32.mrf.mxu0
        %562 = vdwg.mxu0
        %563 = vmatpush.bf16.msra.mxu0 0
        %564 = vmatpush.bf16.msra.mxu0 0
        %565 = vmatpush.bf16.msra.mxu0 0
        %566 = vmatpush.bf16.msra.mxu0 0
        %567 = vmatpush.bf16.msra.mxu0 0
        %568 = vmatpush.bf16.msra.mxu0 0
        %569 = vmatpush.bf16.msra.mxu0 0
        %570 = vmatpush.bf16.msra.mxu0 %v545
        %571 = vmatmul.bf16.gmra.mxu0 %v539
        %v572 = vpop.f32.mrf.mxu0
        %v573 = vadd.f32 %v560, %v572
        %v574 = vpop.f32.mrf.mxu0
        %575 = vdwg.mxu0
        %576 = vmatpush.bf16.msra.mxu0 %v518
        %577 = vmatpush.bf16.msra.mxu0 %v516
        %578 = vmatpush.bf16.msra.mxu0 %v514
        %579 = vmatpush.bf16.msra.mxu0 %v512
        %580 = vmatpush.bf16.msra.mxu0 %v510
        %581 = vmatpush.bf16.msra.mxu0 %v508
        %582 = vmatpush.bf16.msra.mxu0 %v506
        %583 = vmatpush.bf16.msra.mxu0 %v504
        %584 = vmatmul.bf16.gmra.mxu0 %v449
        %v585 = vpop.f32.mrf.mxu0
        %v586 = vadd.f32 0.0, %v585
        %v587 = vpop.f32.mrf.mxu0
        %588 = vdwg.mxu0
        %589 = vmatpush.bf16.msra.mxu0 0
        %590 = vmatpush.bf16.msra.mxu0 0
        %591 = vmatpush.bf16.msra.mxu0 0
        %592 = vmatpush.bf16.msra.mxu0 0
        %593 = vmatpush.bf16.msra.mxu0 0
        %594 = vmatpush.bf16.msra.mxu0 0
        %595 = vmatpush.bf16.msra.mxu0 0
        %596 = vmatpush.bf16.msra.mxu0 %v548
        %597 = vmatmul.bf16.gmra.mxu0 %v539
        %v598 = vpop.f32.mrf.mxu0
        %v599 = vadd.f32 %v586, %v598
        %v600 = vpop.f32.mrf.mxu0
        %601 = vdwg.mxu0
        %v602 = vld [vmem:[#allocation10] sm:$0xff]
        %v603 = vld [vmem:[#allocation10 + $0x8] sm:$0xff]
        %v604 = vld [vmem:[#allocation10 + $0x10] sm:$0xff]
        %v605 = vld [vmem:[#allocation10 + $0x18] sm:$0xff]
        %v606 = vld [vmem:[#allocation10 + $0x20] sm:$0xff]
        %v607 = vld [vmem:[#allocation10 + $0x28] sm:$0xff]
        %v608 = vld [vmem:[#allocation10 + $0x30] sm:$0xff]
        %v609 = vld [vmem:[#allocation10 + $0x38] sm:$0xff]
        %v610 = vld [vmem:[#allocation10 + $0x40] sm:$0xff]
        %v611 = vld [vmem:[#allocation10 + $0x48] sm:$0xff]
        %v612 = vld [vmem:[#allocation10 + $0x50] sm:$0xff]
        %v613 = vld [vmem:[#allocation10 + $0x58] sm:$0xff]
        %v614 = vld [vmem:[#allocation10 + $0x60] sm:$0xff]
        %v615 = vld [vmem:[#allocation10 + $0x68] sm:$0xff]
        %v616 = vld [vmem:[#allocation10 + $0x70] sm:$0xff]
        %v617 = vld [vmem:[#allocation10 + $0x78] sm:$0xff]
        %v618 = vld [vmem:[#allocation10 + $0x80] sm:$0x11]
        %v636 = vunpack.c.l.b16 %v602
        %v637 = vunpack.c.h.b16 %v602
        %v638 = vunpack.c.l.b16 %v603
        %v639 = vunpack.c.h.b16 %v603
        %v640 = vunpack.c.l.b16 %v604
        %v641 = vunpack.c.h.b16 %v604
        %v642 = vunpack.c.l.b16 %v605
        %v643 = vunpack.c.h.b16 %v605
        %v644 = vunpack.c.l.b16 %v606
        %v645 = vunpack.c.h.b16 %v606
        %v646 = vunpack.c.l.b16 %v607
        %v647 = vunpack.c.h.b16 %v607
        %v648 = vunpack.c.l.b16 %v608
        %v649 = vunpack.c.h.b16 %v608
        %v650 = vunpack.c.l.b16 %v609
        %v651 = vunpack.c.h.b16 %v609
        %v652 = vunpack.c.l.b16 %v610
        %v653 = vunpack.c.h.b16 %v610
        %v654 = vunpack.c.l.b16 %v611
        %v655 = vunpack.c.h.b16 %v611
        %v656 = vunpack.c.l.b16 %v612
        %v657 = vunpack.c.h.b16 %v612
        %v658 = vunpack.c.l.b16 %v613
        %v659 = vunpack.c.h.b16 %v613
        %v660 = vunpack.c.l.b16 %v614
        %v661 = vunpack.c.h.b16 %v614
        %v662 = vunpack.c.l.b16 %v615
        %v663 = vunpack.c.h.b16 %v615
        %v664 = vunpack.c.l.b16 %v616
        %v665 = vunpack.c.h.b16 %v616
        %v666 = vunpack.c.l.b16 %v617
        %v667 = vunpack.c.h.b16 %v617
        %v668 = vunpack.c.l.b16 %v618
        %v669 = vunpack.c.h.b16 %v618
        %v670 = vpack.c.b16 %v638, %v636
        %v671 = vpack.c.b16 %v639, %v637
        %v672 = vpack.c.b16 %v642, %v640
        %v673 = vpack.c.b16 %v643, %v641
        %v674 = vpack.c.b16 %v646, %v644
        %v675 = vpack.c.b16 %v647, %v645
        %v676 = vpack.c.b16 %v650, %v648
        %v677 = vpack.c.b16 %v651, %v649
        %v678 = vpack.c.b16 %v654, %v652
        %v679 = vpack.c.b16 %v655, %v653
        %v680 = vpack.c.b16 %v658, %v656
        %v681 = vpack.c.b16 %v659, %v657
        %v682 = vpack.c.b16 %v662, %v660
        %v683 = vpack.c.b16 %v663, %v661
        %v684 = vpack.c.b16 %v666, %v664
        %v685 = vpack.c.b16 %v667, %v665
        %v686 = vpack.c.b16 %v668, %v668
        %v687 = vpack.c.b16 %v669, %v669
        %v705 = vand.u32 %v686, %v543
        %v708 = vand.u32 %v687, %v543
        %710 = vmatpush.bf16.msra.mxu0 %v684
        %711 = vmatpush.bf16.msra.mxu0 %v682
        %712 = vmatpush.bf16.msra.mxu0 %v680
        %713 = vmatpush.bf16.msra.mxu0 %v678
        %714 = vmatpush.bf16.msra.mxu0 %v676
        %715 = vmatpush.bf16.msra.mxu0 %v674
        %716 = vmatpush.bf16.msra.mxu0 %v672
        %717 = vmatpush.bf16.msra.mxu0 %v670
        %718 = vmatmul.bf16.gmra.mxu0 %v449
        %v719 = vpop.f32.mrf.mxu0
        %v720 = vadd.f32 0.0, %v719
        %v721 = vpop.f32.mrf.mxu0
        %722 = vdwg.mxu0
        %723 = vmatpush.bf16.msra.mxu0 0
        %724 = vmatpush.bf16.msra.mxu0 0
        %725 = vmatpush.bf16.msra.mxu0 0
        %726 = vmatpush.bf16.msra.mxu0 0
        %727 = vmatpush.bf16.msra.mxu0 0
        %728 = vmatpush.bf16.msra.mxu0 0
        %729 = vmatpush.bf16.msra.mxu0 0
        %730 = vmatpush.bf16.msra.mxu0 %v705
        %731 = vmatmul.bf16.gmra.mxu0 %v539
        %v732 = vpop.f32.mrf.mxu0
        %v733 = vadd.f32 %v720, %v732
        %v734 = vpop.f32.mrf.mxu0
        %735 = vdwg.mxu0
        %736 = vmatpush.bf16.msra.mxu0 %v685
        %737 = vmatpush.bf16.msra.mxu0 %v683
        %738 = vmatpush.bf16.msra.mxu0 %v681
        %739 = vmatpush.bf16.msra.mxu0 %v679
        %740 = vmatpush.bf16.msra.mxu0 %v677
        %741 = vmatpush.bf16.msra.mxu0 %v675
        %742 = vmatpush.bf16.msra.mxu0 %v673
        %743 = vmatpush.bf16.msra.mxu0 %v671
        %744 = vmatmul.bf16.gmra.mxu0 %v449
        %v745 = vpop.f32.mrf.mxu0
        %v746 = vadd.f32 0.0, %v745
        %v747 = vpop.f32.mrf.mxu0
        %748 = vdwg.mxu0
        %749 = vmatpush.bf16.msra.mxu0 0
        %750 = vmatpush.bf16.msra.mxu0 0
        %751 = vmatpush.bf16.msra.mxu0 0
        %752 = vmatpush.bf16.msra.mxu0 0
        %753 = vmatpush.bf16.msra.mxu0 0
        %754 = vmatpush.bf16.msra.mxu0 0
        %755 = vmatpush.bf16.msra.mxu0 0
        %756 = vmatpush.bf16.msra.mxu0 %v708
        %757 = vmatmul.bf16.gmra.mxu0 %v539
        %v758 = vpop.f32.mrf.mxu0
        %v759 = vadd.f32 %v746, %v758
        %v760 = vpop.f32.mrf.mxu0
        %761 = vdwg.mxu0
        %v762 = vld [vmem:[#allocation5] sm:$0xff]
        %v763 = vld [vmem:[#allocation5 + $0x8] sm:$0xff]
        %v764 = vld [vmem:[#allocation7] sm:$0xff]
        %v765 = vld [vmem:[#allocation7 + $0x8] sm:$0xff]
        %v766 = vmul.f32 %v573, %v762
        %v767 = vmul.f32 %v599, %v763
        %v768 = vmul.f32 %v733, %v764
        %v769 = vmul.f32 %v759, %v765
        %v770 = vsub.f32 %v766, %v768
        %v771 = vsub.f32 %v767, %v769
        %v772 = vpack.c.bf16 %v770, %v770
        %v773 = vpack.c.bf16 %v771, %v771
        %v774 = vmul.f32 %v733, %v762
        %v775 = vmul.f32 %v759, %v763
        %v776 = vmul.f32 %v573, %v764
        %v777 = vmul.f32 %v599, %v765
        %v778 = vadd.f32 %v774, %v776
        %v779 = vadd.f32 %v775, %v777
        %v780 = vpack.c.bf16 %v778, %v778
        %v781 = vpack.c.bf16 %v779, %v779
        %v782 = vld [vmem:[#allocation11] sm:$0xff]
        %v783 = vld [vmem:[#allocation11 + $0x8] sm:$0xff]
        %v784 = vld [vmem:[#allocation11 + $0x10] sm:$0xff]
        %v785 = vld [vmem:[#allocation11 + $0x18] sm:$0xff]
        %v786 = vld [vmem:[#allocation11 + $0x20] sm:$0xff]
        %v787 = vld [vmem:[#allocation11 + $0x28] sm:$0xff]
        %v788 = vld [vmem:[#allocation11 + $0x30] sm:$0xff]
        %v789 = vld [vmem:[#allocation11 + $0x38] sm:$0xff]
        %v790 = vld [vmem:[#allocation11 + $0x40] sm:$0xff]
        %v791 = vld [vmem:[#allocation11 + $0x48] sm:$0xff]
        %v792 = vld [vmem:[#allocation11 + $0x50] sm:$0xff]
        %v793 = vld [vmem:[#allocation11 + $0x58] sm:$0xff]
        %v794 = vld [vmem:[#allocation11 + $0x60] sm:$0xff]
        %v795 = vld [vmem:[#allocation11 + $0x68] sm:$0xff]
        %v796 = vld [vmem:[#allocation11 + $0x70] sm:$0xff]
        %v797 = vld [vmem:[#allocation11 + $0x78] sm:$0xff]
        %v798 = vld [vmem:[#allocation11 + $0x80] sm:$0x11]
        %v799 = vld [vmem:[#allocation13] sm:$0xff]
        %v800 = vld [vmem:[#allocation13 + $0x8] sm:$0xff]
        %v801 = vld [vmem:[#allocation13 + $0x10] sm:$0xff]
        %v802 = vld [vmem:[#allocation13 + $0x18] sm:$0xff]
        %v803 = vld [vmem:[#allocation13 + $0x20] sm:$0xff]
        %v804 = vld [vmem:[#allocation13 + $0x28] sm:$0xff]
        %v805 = vld [vmem:[#allocation13 + $0x30] sm:$0xff]
        %v806 = vld [vmem:[#allocation13 + $0x38] sm:$0xff]
        %v807 = vld [vmem:[#allocation13 + $0x40] sm:$0xff]
        %v808 = vld [vmem:[#allocation13 + $0x48] sm:$0xff]
        %v809 = vld [vmem:[#allocation13 + $0x50] sm:$0xff]
        %v810 = vld [vmem:[#allocation13 + $0x58] sm:$0xff]
        %v811 = vld [vmem:[#allocation13 + $0x60] sm:$0xff]
        %v812 = vld [vmem:[#allocation13 + $0x68] sm:$0xff]
        %v813 = vld [vmem:[#allocation13 + $0x70] sm:$0xff]
        %v814 = vld [vmem:[#allocation13 + $0x78] sm:$0xff]
        %v815 = vld [vmem:[#allocation13 + $0x80] sm:$0x11]
        %v833 = vunpack.c.l.b16 %v799
        %v834 = vunpack.c.h.b16 %v799
        %v835 = vunpack.c.l.b16 %v800
        %v836 = vunpack.c.h.b16 %v800
        %v837 = vunpack.c.l.b16 %v801
        %v838 = vunpack.c.h.b16 %v801
        %v839 = vunpack.c.l.b16 %v802
        %v840 = vunpack.c.h.b16 %v802
        %v841 = vunpack.c.l.b16 %v803
        %v842 = vunpack.c.h.b16 %v803
        %v843 = vunpack.c.l.b16 %v804
        %v844 = vunpack.c.h.b16 %v804
        %v845 = vunpack.c.l.b16 %v805
        %v846 = vunpack.c.h.b16 %v805
        %v847 = vunpack.c.l.b16 %v806
        %v848 = vunpack.c.h.b16 %v806
        %v849 = vunpack.c.l.b16 %v807
        %v850 = vunpack.c.h.b16 %v807
        %v851 = vunpack.c.l.b16 %v808
        %v852 = vunpack.c.h.b16 %v808
        %v853 = vunpack.c.l.b16 %v809
        %v854 = vunpack.c.h.b16 %v809
        %v855 = vunpack.c.l.b16 %v810
        %v856 = vunpack.c.h.b16 %v810
        %v857 = vunpack.c.l.b16 %v811
        %v858 = vunpack.c.h.b16 %v811
        %v859 = vunpack.c.l.b16 %v812
        %v860 = vunpack.c.h.b16 %v812
        %v861 = vunpack.c.l.b16 %v813
        %v862 = vunpack.c.h.b16 %v813
        %v863 = vunpack.c.l.b16 %v814
        %v864 = vunpack.c.h.b16 %v814
        %v865 = vunpack.c.l.b16 %v815
        %v866 = vunpack.c.h.b16 %v815
        %v867 = vpack.c.b16 %v835, %v833
        %v868 = vpack.c.b16 %v836, %v834
        %v869 = vpack.c.b16 %v839, %v837
        %v870 = vpack.c.b16 %v840, %v838
        %v871 = vpack.c.b16 %v843, %v841
        %v872 = vpack.c.b16 %v844, %v842
        %v873 = vpack.c.b16 %v847, %v845
        %v874 = vpack.c.b16 %v848, %v846
        %v875 = vpack.c.b16 %v851, %v849
        %v876 = vpack.c.b16 %v852, %v850
        %v877 = vpack.c.b16 %v855, %v853
        %v878 = vpack.c.b16 %v856, %v854
        %v879 = vpack.c.b16 %v859, %v857
        %v880 = vpack.c.b16 %v860, %v858
        %v881 = vpack.c.b16 %v863, %v861
        %v882 = vpack.c.b16 %v864, %v862
        %v883 = vpack.c.b16 %v865, %v865
        %v884 = vpack.c.b16 %v866, %v866
        %v902 = vsel %vm537, %v781, 0
        %v905 = vand.u32 %v883, %v543
        %v908 = vand.u32 %v884, %v543
        %910 = vmatpush.bf16.msra.mxu0 %v881
        %911 = vmatpush.bf16.msra.mxu0 %v879
        %912 = vmatpush.bf16.msra.mxu0 %v877
        %913 = vmatpush.bf16.msra.mxu0 %v875
        %914 = vmatpush.bf16.msra.mxu0 %v873
        %915 = vmatpush.bf16.msra.mxu0 %v871
        %916 = vmatpush.bf16.msra.mxu0 %v869
        %917 = vmatpush.bf16.msra.mxu0 %v867
        %918 = vmatmul.bf16.gmra.mxu0 %v780
        %v919 = vpop.f32.mrf.mxu0
        %v920 = vadd.f32 0.0, %v919
        %v921 = vpop.f32.mrf.mxu0
        %922 = vdwg.mxu0
        %923 = vmatpush.bf16.msra.mxu0 0
        %924 = vmatpush.bf16.msra.mxu0 0
        %925 = vmatpush.bf16.msra.mxu0 0
        %926 = vmatpush.bf16.msra.mxu0 0
        %927 = vmatpush.bf16.msra.mxu0 0
        %928 = vmatpush.bf16.msra.mxu0 0
        %929 = vmatpush.bf16.msra.mxu0 0
        %930 = vmatpush.bf16.msra.mxu0 %v905
        %931 = vmatmul.bf16.gmra.mxu0 %v902
        %v932 = vpop.f32.mrf.mxu0
        %v933 = vadd.f32 %v920, %v932
        %v934 = vpop.f32.mrf.mxu0
        %935 = vdwg.mxu0
        %936 = vmatpush.bf16.msra.mxu0 %v882
        %937 = vmatpush.bf16.msra.mxu0 %v880
        %938 = vmatpush.bf16.msra.mxu0 %v878
        %939 = vmatpush.bf16.msra.mxu0 %v876
        %940 = vmatpush.bf16.msra.mxu0 %v874
        %941 = vmatpush.bf16.msra.mxu0 %v872
        %942 = vmatpush.bf16.msra.mxu0 %v870
        %943 = vmatpush.bf16.msra.mxu0 %v868
        %944 = vmatmul.bf16.gmra.mxu0 %v780
        %v945 = vpop.f32.mrf.mxu0
        %v946 = vadd.f32 0.0, %v945
        %v947 = vpop.f32.mrf.mxu0
        %948 = vdwg.mxu0
        %949 = vmatpush.bf16.msra.mxu0 0
        %950 = vmatpush.bf16.msra.mxu0 0
        %951 = vmatpush.bf16.msra.mxu0 0
        %952 = vmatpush.bf16.msra.mxu0 0
        %953 = vmatpush.bf16.msra.mxu0 0
        %954 = vmatpush.bf16.msra.mxu0 0
        %955 = vmatpush.bf16.msra.mxu0 0
        %956 = vmatpush.bf16.msra.mxu0 %v908
        %957 = vmatmul.bf16.gmra.mxu0 %v902
        %v958 = vpop.f32.mrf.mxu0
        %v959 = vadd.f32 %v946, %v958
        %v960 = vpop.f32.mrf.mxu0
        %961 = vdwg.mxu0
        %v979 = vunpack.c.l.b16 %v782
        %v980 = vunpack.c.h.b16 %v782
        %v981 = vunpack.c.l.b16 %v783
        %v982 = vunpack.c.h.b16 %v783
        %v983 = vunpack.c.l.b16 %v784
        %v984 = vunpack.c.h.b16 %v784
        %v985 = vunpack.c.l.b16 %v785
        %v986 = vunpack.c.h.b16 %v785
        %v987 = vunpack.c.l.b16 %v786
        %v988 = vunpack.c.h.b16 %v786
        %v989 = vunpack.c.l.b16 %v787
        %v990 = vunpack.c.h.b16 %v787
        %v991 = vunpack.c.l.b16 %v788
        %v992 = vunpack.c.h.b16 %v788
        %v993 = vunpack.c.l.b16 %v789
        %v994 = vunpack.c.h.b16 %v789
        %v995 = vunpack.c.l.b16 %v790
        %v996 = vunpack.c.h.b16 %v790
        %v997 = vunpack.c.l.b16 %v791
        %v998 = vunpack.c.h.b16 %v791
        %v999 = vunpack.c.l.b16 %v792
        %v1000 = vunpack.c.h.b16 %v792
        %v1001 = vunpack.c.l.b16 %v793
        %v1002 = vunpack.c.h.b16 %v793
        %v1003 = vunpack.c.l.b16 %v794
        %v1004 = vunpack.c.h.b16 %v794
        %v1005 = vunpack.c.l.b16 %v795
        %v1006 = vunpack.c.h.b16 %v795
        %v1007 = vunpack.c.l.b16 %v796
        %v1008 = vunpack.c.h.b16 %v796
        %v1009 = vunpack.c.l.b16 %v797
        %v1010 = vunpack.c.h.b16 %v797
        %v1011 = vunpack.c.l.b16 %v798
        %v1012 = vunpack.c.h.b16 %v798
        %v1013 = vpack.c.b16 %v981, %v979
        %v1014 = vpack.c.b16 %v982, %v980
        %v1015 = vpack.c.b16 %v985, %v983
        %v1016 = vpack.c.b16 %v986, %v984
        %v1017 = vpack.c.b16 %v989, %v987
        %v1018 = vpack.c.b16 %v990, %v988
        %v1019 = vpack.c.b16 %v993, %v991
        %v1020 = vpack.c.b16 %v994, %v992
        %v1021 = vpack.c.b16 %v997, %v995
        %v1022 = vpack.c.b16 %v998, %v996
        %v1023 = vpack.c.b16 %v1001, %v999
        %v1024 = vpack.c.b16 %v1002, %v1000
        %v1025 = vpack.c.b16 %v1005, %v1003
        %v1026 = vpack.c.b16 %v1006, %v1004
        %v1027 = vpack.c.b16 %v1009, %v1007
        %v1028 = vpack.c.b16 %v1010, %v1008
        %v1029 = vpack.c.b16 %v1011, %v1011
        %v1030 = vpack.c.b16 %v1012, %v1012
        %v1048 = vsel %vm537, %v773, 0
        %v1051 = vand.u32 %v1029, %v543
        %v1054 = vand.u32 %v1030, %v543
        %1056 = vmatpush.bf16.msra.mxu0 %v1027
        %1057 = vmatpush.bf16.msra.mxu0 %v1025
        %1058 = vmatpush.bf16.msra.mxu0 %v1023
        %1059 = vmatpush.bf16.msra.mxu0 %v1021
        %1060 = vmatpush.bf16.msra.mxu0 %v1019
        %1061 = vmatpush.bf16.msra.mxu0 %v1017
        %1062 = vmatpush.bf16.msra.mxu0 %v1015
        %1063 = vmatpush.bf16.msra.mxu0 %v1013
        %1064 = vmatmul.bf16.gmra.mxu0 %v772
        %v1065 = vpop.f32.mrf.mxu0
        %v1066 = vadd.f32 %v933, %v1065
        %v1067 = vpop.f32.mrf.mxu0
        %1068 = vdwg.mxu0
        %1069 = vmatpush.bf16.msra.mxu0 0
        %1070 = vmatpush.bf16.msra.mxu0 0
        %1071 = vmatpush.bf16.msra.mxu0 0
        %1072 = vmatpush.bf16.msra.mxu0 0
        %1073 = vmatpush.bf16.msra.mxu0 0
        %1074 = vmatpush.bf16.msra.mxu0 0
        %1075 = vmatpush.bf16.msra.mxu0 0
        %1076 = vmatpush.bf16.msra.mxu0 %v1051
        %1077 = vmatmul.bf16.gmra.mxu0 %v1048
        %v1078 = vpop.f32.mrf.mxu0
        %v1079 = vadd.f32 %v1066, %v1078
        %v1080 = vpop.f32.mrf.mxu0
        %1081 = vdwg.mxu0
        %1082 = vmatpush.bf16.msra.mxu0 %v1028
        %1083 = vmatpush.bf16.msra.mxu0 %v1026
        %1084 = vmatpush.bf16.msra.mxu0 %v1024
        %1085 = vmatpush.bf16.msra.mxu0 %v1022
        %1086 = vmatpush.bf16.msra.mxu0 %v1020
        %1087 = vmatpush.bf16.msra.mxu0 %v1018
        %1088 = vmatpush.bf16.msra.mxu0 %v1016
        %1089 = vmatpush.bf16.msra.mxu0 %v1014
        %1090 = vmatmul.bf16.gmra.mxu0 %v772
        %v1091 = vpop.f32.mrf.mxu0
        %v1092 = vadd.f32 %v959, %v1091
        %v1093 = vpop.f32.mrf.mxu0
        %1094 = vdwg.mxu0
        %1095 = vmatpush.bf16.msra.mxu0 0
        %1096 = vmatpush.bf16.msra.mxu0 0
        %1097 = vmatpush.bf16.msra.mxu0 0
        %1098 = vmatpush.bf16.msra.mxu0 0
        %1099 = vmatpush.bf16.msra.mxu0 0
        %1100 = vmatpush.bf16.msra.mxu0 0
        %1101 = vmatpush.bf16.msra.mxu0 0
        %1102 = vmatpush.bf16.msra.mxu0 %v1054
        %1103 = vmatmul.bf16.gmra.mxu0 %v1048
        %v1104 = vpop.f32.mrf.mxu0
        %v1105 = vadd.f32 %v1092, %v1104
        %v1106 = vpop.f32.mrf.mxu0
        %1107 = vdwg.mxu0
        %1108 = vst [vmem:[%s424] sm:$0xff] %v1079
        %1109 = vst [vmem:[%s424 + $0x8] sm:$0xff] %v1105
        %s1110 = sand.u32 %s213, 1
        %s1111 = scalar_lea.sflag [#allocation4], %s1110
        %s1112 = sand.u32 %s213, 1
        %s1113 = smul.addr %s1112, 16
        %s1114 = scalar_lea.vmem [#allocation14], %s1113
        // Predicated region
        $region77: #{tpu_custom_call.1} parent=47 // pred_check
          %p1115 = pneg %p223
        $region78: #{tpu_custom_call.1} parent=47 // pred_check_branch
          %1117 = sbr.rel (%p1115) target = $region80
        $region79: #{tpu_custom_call.1} parent=47 // pred_region
          %s1118 = smul.u32 2, %s32
          %1120 = vsyncadd %s1111, 0
          %s1121 = smul.addr %s31, 4
          %s1122 = sadd.s32 %s1118, %s1121
          %s1123 = smul.addr %s1122, 8
          %s1124 = scalar_lea.hbm %s7, %s1123
          %s1126 = sshll.u32 %s1114, 4
          %s1127 = int_to_ptr.vmem [resolvable:$true] %s1126
          %s1128 = sshll.u32 %s1124, 4
          %s1129 = int_to_ptr.hbm [resolvable:$true] %s1128
          %1131 = dma.vmem_to_hbm [thread:$0]  %s1127, 256, %s1129, %s1111
        $region80: #{tpu_custom_call.1} parent=47 // pred_fallthru
          _
      $region48: #{tpu_custom_call.1} parent=5 // pred_fallthru
        _
      %p1132 = scmp.le.s32.totalorder 2, %s22
      // Predicated region
      $region81: #{tpu_custom_call.1} parent=5 // pred_check
        %p1133 = pneg %p1132
      $region82: #{tpu_custom_call.1} parent=5 // pred_check_branch
        %1135 = sbr.rel (%p1133) target = $region84
      $region83: #{tpu_custom_call.1} parent=5 // pred_region
        %s1136 = ssub.s32 %s22, 2
        // Predicated region
        $region85: #{tpu_custom_call.1} parent=83 // pred_check
          %p1137 = pneg %p229
        $region86: #{tpu_custom_call.1} parent=83 // pred_check_branch
          %1139 = sbr.rel (%p1137) target = $region88
        $region87: #{tpu_custom_call.1} parent=83 // pred_region
          %s1140 = sand.u32 %s214, 1
          %s1141 = scalar_lea.sflag [#allocation4], %s1140
          %s1142 = sand.u32 %s214, 1
          %s1143 = smul.addr %s1142, 16
          %s1144 = scalar_lea.vmem [#allocation14], %s1143
          %1146 = dma.done %s1141, 256
        $region88: #{tpu_custom_call.1} parent=83 // pred_fallthru
          _
      $region84: #{tpu_custom_call.1} parent=5 // pred_fallthru
        _
    $region6: #{tpu_custom_call.1} parent=1 // loop_footer
      %s26 = sadd.s32 1, %s22
    $region7: #{tpu_custom_call.1} parent=1 // loop_footer_branch
      %21 = sbr.rel target = $region3
    $region8: #{tpu_custom_call.1} parent=1 // loop_exit
      _
    %1147 = vsyncpa [#allocation3], 1
    %s1148 = scalar_lea.sflag [#allocation3], 1
    %1149 = vsyncpa %s1148, 1
    %1150 = vsyncpa [#allocation6], 1
    %1151 = vsyncpa [#allocation9], 1
    %1152 = vsyncpa [#allocation12], 1
    %1153 = vsyncpa [#allocation4], 1
    %s1154 = scalar_lea.sflag [#allocation4], 1
    %1155 = vsyncpa %s1154, 1

</llo_original>
